<compile_context>
chip_gen: v5e
topology: v5e:2x2
jax: 0.10.0
libtpu: 0.0.40
codegen_flags: <defaults>
</compile_context>

<pallas_src>
import functools

import jax
import jax.numpy as jnp
from jax import lax
from jax.experimental import pallas as pl
from jax.experimental.pallas import tpu as pltpu


def _dense_layer_kernel(x_ref, s1_ref, b1_ref, w1_ref, b2_ref, w2_ref, m_ref,
                        o_ref, pad_ref, *, H, W, off):
    """Fused BN1+ReLU -> conv1(1x1) -> BN2+ReLU -> conv2(3x3, pad 1), one image.

    x_ref  : (1, Cin, H*W)     f32   channel-major input, spatial flattened
    s1/b1  : (Cin, 1)          f32   folded BN1 scale / bias
    w1_ref : (Cmid, Cin)       bf16  conv1 weight with BN2 scale folded in
    b2_ref : (Cmid, 1)         f32   folded BN2 bias
    w2_ref : (9, Cout, Cmid)   bf16  conv2 taps, index = ky*3 + kx
    m_ref  : (3, 1, H*W)       f32   W-axis validity mask per kx (left/center/right)
    o_ref  : (1, Cout, H*W)    f32   output
    pad_ref: (Cmid, H*W+2*off) f32   VMEM scratch; zero halo = implicit conv padding
    """
    hw = H * W

    # ---- BN1 + ReLU (f32 elementwise on the VPU) ----
    x = x_ref[0]                                                  # (Cin, HW)
    h = jnp.maximum(x * s1_ref[...] + b1_ref[...], 0.0)

    # ---- conv1 (1x1) as a lane-dense channel matmul (bf16 in, f32 accumulate).
    # BN2's scale is pre-folded into w1, so only bias + ReLU remain here.
    y = lax.dot_general(w1_ref[...], h.astype(jnp.bfloat16),
                        (((1,), (0,)), ((), ())),
                        preferred_element_type=jnp.float32)       # (Cmid, HW)
    h2 = jnp.maximum(y + b2_ref[...], 0.0)

    # ---- implicit zero padding: memset the flat scratch, write the interior ----
    pad_ref[...] = jnp.zeros(pad_ref.shape, pad_ref.dtype)
    pad_ref[:, off:off + hw] = h2                                 # lane-aligned store

    # ---- conv2 (3x3, pad 1): 9 shifted + masked lane-dense matmuls.
    # Shift in flattened row-major space is s = (ky-1)*W + (kx-1).  Rows that fall
    # outside the image land in the zero halo of the scratch; column shifts that
    # would wrap across a row boundary are zeroed by the per-kx mask.
    cout = o_ref.shape[1]
    acc = jnp.zeros((cout, hw), jnp.float32)
    for ky in range(3):
        for kx in range(3):
            s = (ky - 1) * W + (kx - 1)
            patch = pad_ref[:, off + s:off + s + hw]              # (Cmid, HW)
            tap = (patch * m_ref[kx]).astype(jnp.bfloat16)
            acc = acc + lax.dot_general(w2_ref[ky * 3 + kx], tap,
                                        (((1,), (0,)), ((), ())),
                                        preferred_element_type=jnp.float32)

    o_ref[0] = acc.astype(o_ref.dtype)


def dense_layer_forward(x_nchw, params):
    """Forward pass of _DenseLayer (inference). x_nchw: (N, Cin, H, W) f32, NCHW."""
    (s1, b1, w1, s2, b2, w2) = params
    N, Cin, H, W = x_nchw.shape
    Cmid = w1.shape[1]
    Cout = w2.shape[3]
    hw = H * W

    # NCHW -> (N, Cin, H*W): flattening the trailing spatial dims of NCHW is a pure
    # reshape (no transpose / extra HBM pass); H*W = 256 sits on the lane axis.
    x = x_nchw.reshape(N, Cin, hw)

    # Fold BN2's scale into the conv1 weight (the matmul is linear), transpose the
    # conv weights to channel-major (out, in), and cast weights to bf16 for the MXU.
    w1f = (w1 * s2[None, :]).T.astype(jnp.bfloat16)                    # (Cmid, Cin)
    w2t = jnp.transpose(w2, (0, 1, 3, 2)).reshape(9, Cout, Cmid)
    w2t = w2t.astype(jnp.bfloat16)                                     # (9, Cout, Cmid)

    s1c = s1.reshape(Cin, 1).astype(jnp.float32)
    b1c = b1.reshape(Cin, 1).astype(jnp.float32)
    b2c = b2.reshape(Cmid, 1).astype(jnp.float32)

    # Per-kx validity masks in flattened spatial space: a dx = +-1 shift must not
    # wrap across a row boundary (the dy = +-1 shifts are handled by the zero halo).
    xs = jnp.arange(hw, dtype=jnp.int32) % W
    mask = jnp.stack(
        [((xs + (kx - 1) >= 0) & (xs + (kx - 1) < W)).reshape(1, hw)
         for kx in range(3)], axis=0).astype(jnp.float32)              # (3, 1, HW)

    # Flat scratch: lane-aligned interior offset with >= W+1 zero halo on each side.
    off = ((W + 1 + 127) // 128) * 128
    padded = hw + 2 * off

    kernel = functools.partial(_dense_layer_kernel, H=H, W=W, off=off)

    out = pl.pallas_call(
        kernel,
        out_shape=jax.ShapeDtypeStruct((N, Cout, hw), jnp.float32),
        grid_spec=pltpu.PrefetchScalarGridSpec(
            num_scalar_prefetch=0,
            grid=(N,),
            in_specs=[
                pl.BlockSpec((1, Cin, hw), lambda n: (n, 0, 0)),
                pl.BlockSpec((Cin, 1), lambda n: (0, 0)),
                pl.BlockSpec((Cin, 1), lambda n: (0, 0)),
                pl.BlockSpec((Cmid, Cin), lambda n: (0, 0)),
                pl.BlockSpec((Cmid, 1), lambda n: (0, 0)),
                pl.BlockSpec((9, Cout, Cmid), lambda n: (0, 0, 0)),
                pl.BlockSpec((3, 1, hw), lambda n: (0, 0, 0)),
            ],
            out_specs=pl.BlockSpec((1, Cout, hw), lambda n: (n, 0, 0)),
            scratch_shapes=[pltpu.VMEM((Cmid, padded), jnp.float32)],
        ),
        # Batch axis is 'parallel' so v7x's two TensorCores each take an image.
        # TODO(synk): for realistic DenseNet shapes (Cin ~ 1k, 56x56 maps) tile the
        # grid over H row strips and set vmem_limit_bytes explicitly.
        compiler_params=pltpu.CompilerParams(dimension_semantics=("parallel",)),
    )(x, s1c, b1c, w1f, b2c, w2t, mask)

    # TODO(synk): dropout (drop_rate > 0, training=True) not implemented; with
    # drop_rate = 0.0 / inference it is an identity.
    return out.reshape(N, Cout, H, W)


def make_params(key, num_input_features, growth_rate, bn_size):
    """Deterministic synthetic parameters (BatchNorm folded to scale/bias)."""
    Cin = num_input_features
    Cmid = bn_size * growth_rate
    Cout = growth_rate
    eps = 1e-5
    k = jax.random.split(key, 10)

    # BatchNorm1 (inference): gamma, beta, running_mean, running_var
    g1 = 1.0 + 0.1 * jax.random.normal(k[0], (Cin,), jnp.float32)
    be1 = 0.1 * jax.random.normal(k[1], (Cin,), jnp.float32)
    rm1 = 0.05 * jax.random.normal(k[2], (Cin,), jnp.float32)
    rv1 = 1.0 + 0.1 * jax.random.uniform(k[3], (Cin,), jnp.float32)
    s1 = g1 / jnp.sqrt(rv1 + eps)
    b1 = be1 - rm1 * s1

    # conv1 weight: PyTorch (Cmid, Cin, 1, 1) -> (Cin, Cmid)
    w1 = 0.1 * jax.random.normal(k[4], (Cin, Cmid), jnp.float32)

    # BatchNorm2
    g2 = 1.0 + 0.1 * jax.random.normal(k[5], (Cmid,), jnp.float32)
    be2 = 0.1 * jax.random.normal(k[6], (Cmid,), jnp.float32)
    rm2 = 0.05 * jax.random.normal(k[7], (Cmid,), jnp.float32)
    rv2 = 1.0 + 0.1 * jax.random.uniform(k[8], (Cmid,), jnp.float32)
    s2 = g2 / jnp.sqrt(rv2 + eps)
    b2 = be2 - rm2 * s2

    # conv2 weight: PyTorch (Cout, Cmid, 3, 3) -> HWIO (3, 3, Cmid, Cout)
    w2 = 0.1 * jax.random.normal(k[9], (3, 3, Cmid, Cout), jnp.float32)

    return (s1, b1, w1, s2, b2, w2)


def reference_forward(x_nchw, params):
    """Pure-JAX (f32) reference for correctness checking."""
    (s1, b1, w1, s2, b2, w2) = params
    x = jnp.transpose(x_nchw, (0, 2, 3, 1))
    h = jnp.maximum(x * s1 + b1, 0.0)
    a = jnp.einsum("nhwc,cd->nhwd", h, w1)
    a = jnp.maximum(a * s2 + b2, 0.0)
    y = lax.conv_general_dilated(a, w2, window_strides=(1, 1), padding="SAME",
                                 dimension_numbers=("NHWC", "HWIO", "NHWC"))
    return jnp.transpose(y, (0, 3, 1, 2))


if __name__ == "__main__":
    # Small synthetic configuration consistent with the module's __init__.
    num_input_features, growth_rate, bn_size = 8, 4, 4   # Cin=8, Cmid=16, Cout=4
    N, H, W = 2, 16, 16

    key = jax.random.PRNGKey(0)
    k_in, k_par = jax.random.split(key)
    x = jax.random.normal(k_in, (N, num_input_features, H, W), jnp.float32)
    params = make_params(k_par, num_input_features, growth_rate, bn_size)

    out = jax.block_until_ready(dense_layer_forward(x, params))
    ref = jax.block_until_ready(reference_forward(x, params))

    assert out.shape == (N, growth_rate, H, W)
    # Matmuls run with bf16 operands (f32 accumulation) -> looser tolerance than f32.
    assert jnp.allclose(out, ref, atol=2e-2, rtol=2e-2), "mismatch vs JAX reference"

    print("KERNEL_OK")
</pallas_src>

<mosaic_0001>
module attributes {stable_mosaic.version = 11 : i64} {
  func.func @_dense_layer_kernel(%arg0: i32, %arg1: memref<1x8x256xf32, #tpu.memory_space<vmem>>, %arg2: memref<8x1xf32, #tpu.memory_space<vmem>>, %arg3: memref<8x1xf32, #tpu.memory_space<vmem>>, %arg4: memref<16x8xbf16, #tpu.memory_space<vmem>>, %arg5: memref<16x1xf32, #tpu.memory_space<vmem>>, %arg6: memref<9x4x16xbf16, #tpu.memory_space<vmem>>, %arg7: memref<3x1x256xf32, #tpu.memory_space<vmem>>, %arg8: memref<1x4x256xf32, #tpu.memory_space<vmem>>, %arg9: memref<16x512xf32, #tpu.memory_space<vmem>>) attributes {dimension_semantics = [#tpu.dimension_semantics<parallel>], iteration_bounds = array<i64: 2>, scalar_prefetch = 0 : i64, scratch_operands = 1 : i64, tpu.core_type = #tpu.core_type<tc>, window_params = [{transform_indices = @transform_0, window_bounds = array<i64: 1, 8, 256>}, {pipeline_mode = #tpu.pipeline_mode<synchronous>, transform_indices = @transform_1, window_bounds = array<i64: 8, 1>}, {pipeline_mode = #tpu.pipeline_mode<synchronous>, transform_indices = @transform_2, window_bounds = array<i64: 8, 1>}, {pipeline_mode = #tpu.pipeline_mode<synchronous>, transform_indices = @transform_3, window_bounds = array<i64: 16, 8>}, {pipeline_mode = #tpu.pipeline_mode<synchronous>, transform_indices = @transform_4, window_bounds = array<i64: 16, 1>}, {pipeline_mode = #tpu.pipeline_mode<synchronous>, transform_indices = @transform_5, window_bounds = array<i64: 9, 4, 16>}, {pipeline_mode = #tpu.pipeline_mode<synchronous>, transform_indices = @transform_6, window_bounds = array<i64: 3, 1, 256>}, {transform_indices = @transform_7, window_bounds = array<i64: 1, 4, 256>}]} {
    %c0 = arith.constant 0 : index
    %c0_0 = arith.constant 0 : index
    %c0_1 = arith.constant 0 : index
    %0 = vector.load %arg1[%c0, %c0_0, %c0_1] : memref<1x8x256xf32, #tpu.memory_space<vmem>>, vector<1x8x256xf32>
    %1 = vector.shape_cast %0 : vector<1x8x256xf32> to vector<8x256xf32>
    %c0_2 = arith.constant 0 : index
    %c0_3 = arith.constant 0 : index
    %2 = vector.load %arg2[%c0_2, %c0_3] : memref<8x1xf32, #tpu.memory_space<vmem>>, vector<8x1xf32>
    %3 = vector.broadcast %2 : vector<8x1xf32> to vector<8x256xf32>
    %4 = arith.mulf %1, %3 : vector<8x256xf32>
    %c0_4 = arith.constant 0 : index
    %c0_5 = arith.constant 0 : index
    %5 = vector.load %arg3[%c0_4, %c0_5] : memref<8x1xf32, #tpu.memory_space<vmem>>, vector<8x1xf32>
    %6 = vector.broadcast %5 : vector<8x1xf32> to vector<8x256xf32>
    %7 = arith.addf %4, %6 : vector<8x256xf32>
    %cst = arith.constant 0.000000e+00 : f32
    %8 = vector.broadcast %cst : f32 to vector<8x256xf32>
    %9 = arith.maximumf %7, %8 : vector<8x256xf32>
    %c0_6 = arith.constant 0 : index
    %c0_7 = arith.constant 0 : index
    %10 = vector.load %arg4[%c0_6, %c0_7] : memref<16x8xbf16, #tpu.memory_space<vmem>>, vector<16x8xbf16>
    %11 = arith.truncf %9 : vector<8x256xf32> to vector<8x256xbf16>
    %cst_8 = arith.constant dense<0.000000e+00> : vector<16x256xf32>
    %12 = tpu.matmul %10, %11, %cst_8 {dimension_numbers = #tpu.dot_dimension_numbers<[1], [0], [0], [1], [0, 0, 1, 1], [], []>} : vector<16x8xbf16>, vector<8x256xbf16>, vector<16x256xf32> -> vector<16x256xf32>
    %c0_9 = arith.constant 0 : index
    %c0_10 = arith.constant 0 : index
    %13 = vector.load %arg5[%c0_9, %c0_10] : memref<16x1xf32, #tpu.memory_space<vmem>>, vector<16x1xf32>
    %14 = vector.broadcast %13 : vector<16x1xf32> to vector<16x256xf32>
    %15 = arith.addf %12, %14 : vector<16x256xf32>
    %cst_11 = arith.constant 0.000000e+00 : f32
    %16 = vector.broadcast %cst_11 : f32 to vector<16x256xf32>
    %17 = arith.maximumf %15, %16 : vector<16x256xf32>
    %cst_12 = arith.constant 0.000000e+00 : f32
    %18 = vector.broadcast %cst_12 : f32 to vector<16x512xf32>
    %c0_13 = arith.constant 0 : index
    %c0_14 = arith.constant 0 : index
    %19 = vector.load %arg9[%c0_13, %c0_14] : memref<16x512xf32, #tpu.memory_space<vmem>>, vector<16x512xf32>
    tpu.vector_store %arg9[%c0_13, %c0_14], %18 {strides = array<i32>} : memref<16x512xf32, #tpu.memory_space<vmem>>, vector<16x512xf32>,
    %c0_15 = arith.constant 0 : index
    %c128 = arith.constant 128 : index
    %20 = vector.load %arg9[%c0_15, %c128] : memref<16x512xf32, #tpu.memory_space<vmem>>, vector<16x256xf32>
    tpu.vector_store %arg9[%c0_15, %c128], %17 {strides = array<i32>} : memref<16x512xf32, #tpu.memory_space<vmem>>, vector<16x256xf32>,
    %cst_16 = arith.constant 0.000000e+00 : f32
    %21 = vector.broadcast %cst_16 : f32 to vector<4x256xf32>
    %c0_17 = arith.constant 0 : index
    %c111 = arith.constant 111 : index
    %22 = vector.load %arg9[%c0_17, %c111] : memref<16x512xf32, #tpu.memory_space<vmem>>, vector<16x256xf32>
    %c0_18 = arith.constant 0 : index
    %c0_19 = arith.constant 0 : index
    %c0_20 = arith.constant 0 : index
    %23 = vector.load %arg7[%c0_18, %c0_19, %c0_20] : memref<3x1x256xf32, #tpu.memory_space<vmem>>, vector<1x1x256xf32>
    %24 = vector.shape_cast %23 : vector<1x1x256xf32> to vector<1x256xf32>
    %25 = vector.broadcast %24 : vector<1x256xf32> to vector<16x256xf32>
    %26 = arith.mulf %22, %25 : vector<16x256xf32>
    %27 = arith.truncf %26 : vector<16x256xf32> to vector<16x256xbf16>
    %c0_21 = arith.constant 0 : index
    %c0_22 = arith.constant 0 : index
    %c0_23 = arith.constant 0 : index
    %28 = vector.load %arg6[%c0_21, %c0_22, %c0_23] : memref<9x4x16xbf16, #tpu.memory_space<vmem>>, vector<1x4x16xbf16>
    %29 = vector.shape_cast %28 : vector<1x4x16xbf16> to vector<4x16xbf16>
    %cst_24 = arith.constant dense<0.000000e+00> : vector<4x256xf32>
    %30 = tpu.matmul %29, %27, %cst_24 {dimension_numbers = #tpu.dot_dimension_numbers<[1], [0], [0], [1], [0, 0, 1, 1], [], []>} : vector<4x16xbf16>, vector<16x256xbf16>, vector<4x256xf32> -> vector<4x256xf32>
    %31 = arith.addf %21, %30 : vector<4x256xf32>
    %c0_25 = arith.constant 0 : index
    %c112 = arith.constant 112 : index
    %32 = vector.load %arg9[%c0_25, %c112] : memref<16x512xf32, #tpu.memory_space<vmem>>, vector<16x256xf32>
    %c1 = arith.constant 1 : index
    %c0_26 = arith.constant 0 : index
    %c0_27 = arith.constant 0 : index
    %33 = vector.load %arg7[%c1, %c0_26, %c0_27] : memref<3x1x256xf32, #tpu.memory_space<vmem>>, vector<1x1x256xf32>
    %34 = vector.shape_cast %33 : vector<1x1x256xf32> to vector<1x256xf32>
    %35 = vector.broadcast %34 : vector<1x256xf32> to vector<16x256xf32>
    %36 = arith.mulf %32, %35 : vector<16x256xf32>
    %37 = arith.truncf %36 : vector<16x256xf32> to vector<16x256xbf16>
    %c1_28 = arith.constant 1 : index
    %c0_29 = arith.constant 0 : index
    %c0_30 = arith.constant 0 : index
    %38 = vector.load %arg6[%c1_28, %c0_29, %c0_30] : memref<9x4x16xbf16, #tpu.memory_space<vmem>>, vector<1x4x16xbf16>
    %39 = vector.shape_cast %38 : vector<1x4x16xbf16> to vector<4x16xbf16>
    %cst_31 = arith.constant dense<0.000000e+00> : vector<4x256xf32>
    %40 = tpu.matmul %39, %37, %cst_31 {dimension_numbers = #tpu.dot_dimension_numbers<[1], [0], [0], [1], [0, 0, 1, 1], [], []>} : vector<4x16xbf16>, vector<16x256xbf16>, vector<4x256xf32> -> vector<4x256xf32>
    %41 = arith.addf %31, %40 : vector<4x256xf32>
    %c0_32 = arith.constant 0 : index
    %c113 = arith.constant 113 : index
    %42 = vector.load %arg9[%c0_32, %c113] : memref<16x512xf32, #tpu.memory_space<vmem>>, vector<16x256xf32>
    %c2 = arith.constant 2 : index
    %c0_33 = arith.constant 0 : index
    %c0_34 = arith.constant 0 : index
    %43 = vector.load %arg7[%c2, %c0_33, %c0_34] : memref<3x1x256xf32, #tpu.memory_space<vmem>>, vector<1x1x256xf32>
    %44 = vector.shape_cast %43 : vector<1x1x256xf32> to vector<1x256xf32>
    %45 = vector.broadcast %44 : vector<1x256xf32> to vector<16x256xf32>
    %46 = arith.mulf %42, %45 : vector<16x256xf32>
    %47 = arith.truncf %46 : vector<16x256xf32> to vector<16x256xbf16>
    %c2_35 = arith.constant 2 : index
    %c0_36 = arith.constant 0 : index
    %c0_37 = arith.constant 0 : index
    %48 = vector.load %arg6[%c2_35, %c0_36, %c0_37] : memref<9x4x16xbf16, #tpu.memory_space<vmem>>, vector<1x4x16xbf16>
    %49 = vector.shape_cast %48 : vector<1x4x16xbf16> to vector<4x16xbf16>
    %cst_38 = arith.constant dense<0.000000e+00> : vector<4x256xf32>
    %50 = tpu.matmul %49, %47, %cst_38 {dimension_numbers = #tpu.dot_dimension_numbers<[1], [0], [0], [1], [0, 0, 1, 1], [], []>} : vector<4x16xbf16>, vector<16x256xbf16>, vector<4x256xf32> -> vector<4x256xf32>
    %51 = arith.addf %41, %50 : vector<4x256xf32>
    %c0_39 = arith.constant 0 : index
    %c127 = arith.constant 127 : index
    %52 = vector.load %arg9[%c0_39, %c127] : memref<16x512xf32, #tpu.memory_space<vmem>>, vector<16x256xf32>
    %c0_40 = arith.constant 0 : index
    %c0_41 = arith.constant 0 : index
    %c0_42 = arith.constant 0 : index
    %53 = vector.load %arg7[%c0_40, %c0_41, %c0_42] : memref<3x1x256xf32, #tpu.memory_space<vmem>>, vector<1x1x256xf32>
    %54 = vector.shape_cast %53 : vector<1x1x256xf32> to vector<1x256xf32>
    %55 = vector.broadcast %54 : vector<1x256xf32> to vector<16x256xf32>
    %56 = arith.mulf %52, %55 : vector<16x256xf32>
    %57 = arith.truncf %56 : vector<16x256xf32> to vector<16x256xbf16>
    %c3 = arith.constant 3 : index
    %c0_43 = arith.constant 0 : index
    %c0_44 = arith.constant 0 : index
    %58 = vector.load %arg6[%c3, %c0_43, %c0_44] : memref<9x4x16xbf16, #tpu.memory_space<vmem>>, vector<1x4x16xbf16>
    %59 = vector.shape_cast %58 : vector<1x4x16xbf16> to vector<4x16xbf16>
    %cst_45 = arith.constant dense<0.000000e+00> : vector<4x256xf32>
    %60 = tpu.matmul %59, %57, %cst_45 {dimension_numbers = #tpu.dot_dimension_numbers<[1], [0], [0], [1], [0, 0, 1, 1], [], []>} : vector<4x16xbf16>, vector<16x256xbf16>, vector<4x256xf32> -> vector<4x256xf32>
    %61 = arith.addf %51, %60 : vector<4x256xf32>
    %c0_46 = arith.constant 0 : index
    %c128_47 = arith.constant 128 : index
    %62 = vector.load %arg9[%c0_46, %c128_47] : memref<16x512xf32, #tpu.memory_space<vmem>>, vector<16x256xf32>
    %c1_48 = arith.constant 1 : index
    %c0_49 = arith.constant 0 : index
    %c0_50 = arith.constant 0 : index
    %63 = vector.load %arg7[%c1_48, %c0_49, %c0_50] : memref<3x1x256xf32, #tpu.memory_space<vmem>>, vector<1x1x256xf32>
    %64 = vector.shape_cast %63 : vector<1x1x256xf32> to vector<1x256xf32>
    %65 = vector.broadcast %64 : vector<1x256xf32> to vector<16x256xf32>
    %66 = arith.mulf %62, %65 : vector<16x256xf32>
    %67 = arith.truncf %66 : vector<16x256xf32> to vector<16x256xbf16>
    %c4 = arith.constant 4 : index
    %c0_51 = arith.constant 0 : index
    %c0_52 = arith.constant 0 : index
    %68 = vector.load %arg6[%c4, %c0_51, %c0_52] : memref<9x4x16xbf16, #tpu.memory_space<vmem>>, vector<1x4x16xbf16>
    %69 = vector.shape_cast %68 : vector<1x4x16xbf16> to vector<4x16xbf16>
    %cst_53 = arith.constant dense<0.000000e+00> : vector<4x256xf32>
    %70 = tpu.matmul %69, %67, %cst_53 {dimension_numbers = #tpu.dot_dimension_numbers<[1], [0], [0], [1], [0, 0, 1, 1], [], []>} : vector<4x16xbf16>, vector<16x256xbf16>, vector<4x256xf32> -> vector<4x256xf32>
    %71 = arith.addf %61, %70 : vector<4x256xf32>
    %c0_54 = arith.constant 0 : index
    %c129 = arith.constant 129 : index
    %72 = vector.load %arg9[%c0_54, %c129] : memref<16x512xf32, #tpu.memory_space<vmem>>, vector<16x256xf32>
    %c2_55 = arith.constant 2 : index
    %c0_56 = arith.constant 0 : index
    %c0_57 = arith.constant 0 : index
    %73 = vector.load %arg7[%c2_55, %c0_56, %c0_57] : memref<3x1x256xf32, #tpu.memory_space<vmem>>, vector<1x1x256xf32>
    %74 = vector.shape_cast %73 : vector<1x1x256xf32> to vector<1x256xf32>
    %75 = vector.broadcast %74 : vector<1x256xf32> to vector<16x256xf32>
    %76 = arith.mulf %72, %75 : vector<16x256xf32>
    %77 = arith.truncf %76 : vector<16x256xf32> to vector<16x256xbf16>
    %c5 = arith.constant 5 : index
    %c0_58 = arith.constant 0 : index
    %c0_59 = arith.constant 0 : index
    %78 = vector.load %arg6[%c5, %c0_58, %c0_59] : memref<9x4x16xbf16, #tpu.memory_space<vmem>>, vector<1x4x16xbf16>
    %79 = vector.shape_cast %78 : vector<1x4x16xbf16> to vector<4x16xbf16>
    %cst_60 = arith.constant dense<0.000000e+00> : vector<4x256xf32>
    %80 = tpu.matmul %79, %77, %cst_60 {dimension_numbers = #tpu.dot_dimension_numbers<[1], [0], [0], [1], [0, 0, 1, 1], [], []>} : vector<4x16xbf16>, vector<16x256xbf16>, vector<4x256xf32> -> vector<4x256xf32>
    %81 = arith.addf %71, %80 : vector<4x256xf32>
    %c0_61 = arith.constant 0 : index
    %c143 = arith.constant 143 : index
    %82 = vector.load %arg9[%c0_61, %c143] : memref<16x512xf32, #tpu.memory_space<vmem>>, vector<16x256xf32>
    %c0_62 = arith.constant 0 : index
    %c0_63 = arith.constant 0 : index
    %c0_64 = arith.constant 0 : index
    %83 = vector.load %arg7[%c0_62, %c0_63, %c0_64] : memref<3x1x256xf32, #tpu.memory_space<vmem>>, vector<1x1x256xf32>
    %84 = vector.shape_cast %83 : vector<1x1x256xf32> to vector<1x256xf32>
    %85 = vector.broadcast %84 : vector<1x256xf32> to vector<16x256xf32>
    %86 = arith.mulf %82, %85 : vector<16x256xf32>
    %87 = arith.truncf %86 : vector<16x256xf32> to vector<16x256xbf16>
    %c6 = arith.constant 6 : index
    %c0_65 = arith.constant 0 : index
    %c0_66 = arith.constant 0 : index
    %88 = vector.load %arg6[%c6, %c0_65, %c0_66] : memref<9x4x16xbf16, #tpu.memory_space<vmem>>, vector<1x4x16xbf16>
    %89 = vector.shape_cast %88 : vector<1x4x16xbf16> to vector<4x16xbf16>
    %cst_67 = arith.constant dense<0.000000e+00> : vector<4x256xf32>
    %90 = tpu.matmul %89, %87, %cst_67 {dimension_numbers = #tpu.dot_dimension_numbers<[1], [0], [0], [1], [0, 0, 1, 1], [], []>} : vector<4x16xbf16>, vector<16x256xbf16>, vector<4x256xf32> -> vector<4x256xf32>
    %91 = arith.addf %81, %90 : vector<4x256xf32>
    %c0_68 = arith.constant 0 : index
    %c144 = arith.constant 144 : index
    %92 = vector.load %arg9[%c0_68, %c144] : memref<16x512xf32, #tpu.memory_space<vmem>>, vector<16x256xf32>
    %c1_69 = arith.constant 1 : index
    %c0_70 = arith.constant 0 : index
    %c0_71 = arith.constant 0 : index
    %93 = vector.load %arg7[%c1_69, %c0_70, %c0_71] : memref<3x1x256xf32, #tpu.memory_space<vmem>>, vector<1x1x256xf32>
    %94 = vector.shape_cast %93 : vector<1x1x256xf32> to vector<1x256xf32>
    %95 = vector.broadcast %94 : vector<1x256xf32> to vector<16x256xf32>
    %96 = arith.mulf %92, %95 : vector<16x256xf32>
    %97 = arith.truncf %96 : vector<16x256xf32> to vector<16x256xbf16>
    %c7 = arith.constant 7 : index
    %c0_72 = arith.constant 0 : index
    %c0_73 = arith.constant 0 : index
    %98 = vector.load %arg6[%c7, %c0_72, %c0_73] : memref<9x4x16xbf16, #tpu.memory_space<vmem>>, vector<1x4x16xbf16>
    %99 = vector.shape_cast %98 : vector<1x4x16xbf16> to vector<4x16xbf16>
    %cst_74 = arith.constant dense<0.000000e+00> : vector<4x256xf32>
    %100 = tpu.matmul %99, %97, %cst_74 {dimension_numbers = #tpu.dot_dimension_numbers<[1], [0], [0], [1], [0, 0, 1, 1], [], []>} : vector<4x16xbf16>, vector<16x256xbf16>, vector<4x256xf32> -> vector<4x256xf32>
    %101 = arith.addf %91, %100 : vector<4x256xf32>
    %c0_75 = arith.constant 0 : index
    %c145 = arith.constant 145 : index
    %102 = vector.load %arg9[%c0_75, %c145] : memref<16x512xf32, #tpu.memory_space<vmem>>, vector<16x256xf32>
    %c2_76 = arith.constant 2 : index
    %c0_77 = arith.constant 0 : index
    %c0_78 = arith.constant 0 : index
    %103 = vector.load %arg7[%c2_76, %c0_77, %c0_78] : memref<3x1x256xf32, #tpu.memory_space<vmem>>, vector<1x1x256xf32>
    %104 = vector.shape_cast %103 : vector<1x1x256xf32> to vector<1x256xf32>
    %105 = vector.broadcast %104 : vector<1x256xf32> to vector<16x256xf32>
    %106 = arith.mulf %102, %105 : vector<16x256xf32>
    %107 = arith.truncf %106 : vector<16x256xf32> to vector<16x256xbf16>
    %c8 = arith.constant 8 : index
    %c0_79 = arith.constant 0 : index
    %c0_80 = arith.constant 0 : index
    %108 = vector.load %arg6[%c8, %c0_79, %c0_80] : memref<9x4x16xbf16, #tpu.memory_space<vmem>>, vector<1x4x16xbf16>
    %109 = vector.shape_cast %108 : vector<1x4x16xbf16> to vector<4x16xbf16>
    %cst_81 = arith.constant dense<0.000000e+00> : vector<4x256xf32>
    %110 = tpu.matmul %109, %107, %cst_81 {dimension_numbers = #tpu.dot_dimension_numbers<[1], [0], [0], [1], [0, 0, 1, 1], [], []>} : vector<4x16xbf16>, vector<16x256xbf16>, vector<4x256xf32> -> vector<4x256xf32>
    %111 = arith.addf %101, %110 : vector<4x256xf32>
    %c0_82 = arith.constant 0 : index
    %c0_83 = arith.constant 0 : index
    %c0_84 = arith.constant 0 : index
    %112 = vector.load %arg8[%c0_82, %c0_83, %c0_84] : memref<1x4x256xf32, #tpu.memory_space<vmem>>, vector<1x4x256xf32>
    %113 = vector.shape_cast %112 : vector<1x4x256xf32> to vector<4x256xf32>
    %114 = vector.shape_cast %111 : vector<4x256xf32> to vector<1x4x256xf32>
    tpu.vector_store %arg8[%c0_82, %c0_83, %c0_84], %114 {strides = array<i32>} : memref<1x4x256xf32, #tpu.memory_space<vmem>>, vector<1x4x256xf32>,
    return
  }
  func.func @transform_0(%arg0: i32) -> (i32, i32, i32) {
    %c0_i32 = arith.constant 0 : i32
    %c0_i32_0 = arith.constant 0 : i32
    %c0_i32_1 = arith.constant 0 : i32
    return %arg0, %c0_i32, %c0_i32_0 : i32, i32, i32
  }
  func.func @transform_1(%arg0: i32) -> (i32, i32) {
    %c0_i32 = arith.constant 0 : i32
    %c0_i32_0 = arith.constant 0 : i32
    %c0_i32_1 = arith.constant 0 : i32
    return %c0_i32, %c0_i32_0 : i32, i32
  }
  func.func @transform_2(%arg0: i32) -> (i32, i32) {
    %c0_i32 = arith.constant 0 : i32
    %c0_i32_0 = arith.constant 0 : i32
    %c0_i32_1 = arith.constant 0 : i32
    return %c0_i32, %c0_i32_0 : i32, i32
  }
  func.func @transform_3(%arg0: i32) -> (i32, i32) {
    %c0_i32 = arith.constant 0 : i32
    %c0_i32_0 = arith.constant 0 : i32
    %c0_i32_1 = arith.constant 0 : i32
    return %c0_i32, %c0_i32_0 : i32, i32
  }
  func.func @transform_4(%arg0: i32) -> (i32, i32) {
    %c0_i32 = arith.constant 0 : i32
    %c0_i32_0 = arith.constant 0 : i32
    %c0_i32_1 = arith.constant 0 : i32
    return %c0_i32, %c0_i32_0 : i32, i32
  }
  func.func @transform_5(%arg0: i32) -> (i32, i32, i32) {
    %c0_i32 = arith.constant 0 : i32
    %c0_i32_0 = arith.constant 0 : i32
    %c0_i32_1 = arith.constant 0 : i32
    %c0_i32_2 = arith.constant 0 : i32
    return %c0_i32, %c0_i32_0, %c0_i32_1 : i32, i32, i32
  }
  func.func @transform_6(%arg0: i32) -> (i32, i32, i32) {
    %c0_i32 = arith.constant 0 : i32
    %c0_i32_0 = arith.constant 0 : i32
    %c0_i32_1 = arith.constant 0 : i32
    %c0_i32_2 = arith.constant 0 : i32
    return %c0_i32, %c0_i32_0, %c0_i32_1 : i32, i32, i32
  }
  func.func @transform_7(%arg0: i32) -> (i32, i32, i32) {
    %c0_i32 = arith.constant 0 : i32
    %c0_i32_0 = arith.constant 0 : i32
    %c0_i32_1 = arith.constant 0 : i32
    return %arg0, %c0_i32, %c0_i32_0 : i32, i32, i32
  }
}

</mosaic_0001>

<llo_original>
// kernel: tpu_custom_call.1
$region0: #{tpu_custom_call.1}
  #allocation0 [shape = 'u32[]', space=smem, size = 0x4, offset = 0x4, fixed_abs, tag = 'smem constant byte address 0x4 - core index']
  #allocation1 [shape = 'u32[72,128]{1,0:T(1,128)}', space=vmem, size = 0x9000, scoped, tag = 'internal scratch']
  #allocation2 [shape = 'f32[16,512]{1,0:T(8,128)}', space=vmem, size = 0x8000, scoped, tag = 'scratch operand']
  %s0 = inlined_call_operand.hbm [shape: f32[2,8,256], index: 0, kind: input, shape index: {}]
  %s1 = inlined_call_operand.vmem [shape: f32[8,1], index: 1, kind: input, shape index: {}]
  %s2 = inlined_call_operand.vmem [shape: f32[8,1], index: 2, kind: input, shape index: {}]
  %s3 = inlined_call_operand.vmem [shape: bf16[16,8], index: 3, kind: input, shape index: {}]
  %s4 = inlined_call_operand.vmem [shape: f32[16,1], index: 4, kind: input, shape index: {}]
  %s5 = inlined_call_operand.vmem [shape: bf16[9,4,16], index: 5, kind: input, shape index: {}]
  %s6 = inlined_call_operand.vmem [shape: f32[3,1,256], index: 6, kind: input, shape index: {}]
  %s7 = inlined_call_operand.hbm [shape: f32[2,4,256], index: 7, kind: output, shape index: {}]
  %s8 = sld [smem:[#allocation0]]
  $region65: #{tpu_custom_call.1} parent=0
    _
  %s10 = ssub.s32 1, %s8
  %s11 = scalar_select 0, %s10, %s8
  $region1: #{tpu_custom_call.1} parent=0
    #allocation3 [shape = 'u8[16384]{0}', space=vmem, size = 0x4000, scoped, tag = 'input window, operand 0']
    #allocation4 [shape = 's32[2]{0}', space=sflag, size = 0x8, scoped, tag = 'scoped memory for tpu_custom_call.1']
    #allocation5 [shape = 's32[2]{0}', space=sflag, size = 0x8, scoped, tag = 'scoped memory for tpu_custom_call.1']
    #allocation6 [shape = 'u8[8192]{0}', space=vmem, size = 0x2000, scoped, tag = 'output window, operand 0']
    %12 = vsyncpa [#allocation4], 0
    %s13 = scalar_lea.sflag [#allocation4], 1
    %14 = vsyncpa %s13, 0
    %15 = vsyncpa [#allocation5], 0
    %s16 = scalar_lea.sflag [#allocation5], 1
    %17 = vsyncpa %s16, 0
    loop: start=0, step=1, limit=4
    $region2: #{tpu_custom_call.1} parent=1 // loop_pre_header
      _
    $region3: #{tpu_custom_call.1} parent=1 // loop_header
      %s19 = sphi 0, %s23
      %p20 = scmp.ge.s32.totalorder %s19, 4
      %s29 = sphi 0, %s31
      %s32 = sphi 0, %s29
      %s33 = sphi 0, %s32
      %s49 = sphi 0, %s33
      %s53 = sphi 0, %s53
      %s55 = sphi 0, %s53
      %s56 = sphi 0, %s55
      %s70 = sphi 0, %s56
      %s74 = sphi 0, %s74
      %s76 = sphi 0, %s74
      %s77 = sphi 0, %s76
      %s91 = sphi 0, %s77
      %s95 = sphi 0, %s95
      %s97 = sphi 0, %s95
      %s98 = sphi 0, %s97
      %s112 = sphi 0, %s98
      %s116 = sphi 0, %s116
      %s118 = sphi 0, %s116
      %s119 = sphi 0, %s118
      %s133 = sphi 0, %s119
      %s137 = sphi 0, %s137
      %s139 = sphi 0, %s137
      %s140 = sphi 0, %s139
      %s154 = sphi 0, %s140
      %s158 = sphi 0, %s158
      %s160 = sphi 0, %s158
      %s161 = sphi 0, %s160
      %s175 = sphi 0, %s161
      %s181 = sphi 0, %s183
      %s184 = sphi 0, %s181
      %s185 = sphi 0, %s184
      %s201 = sphi 0, %s185
    $region4: #{tpu_custom_call.1} parent=1 // loop_header_branch
      %22 = sbr.rel (%p20) target = $region8
    $region5: #{tpu_custom_call.1} parent=1 // loop_body
      %s24 = ssub.s32 %s19, 1
      %s25 = ssub.s32 %s19, 2
      %s26 = sadd.s32 %s19, 1
      %s27 = ssub.s32 %s19, %s26
      %p28 = scmp.eq.s32.totalorder %s27, 0
      %s30 = sadd.s32 %s29, 1
      %s31 = scalar_select %p28, %s29, %s30
      %p34 = pneg %p28
      %p35 = scmp.eq.s32.totalorder %s19, 1
      %p36 = por %p34, %p35
      %p37 = scmp.ne.s32.totalorder %s29, %s32
      %p38 = scmp.eq.s32.totalorder %s19, 0
      %p39 = por %p37, %p38
      %p40 = scmp.ne.s32.totalorder %s29, %s32
      %p41 = scmp.eq.s32.totalorder %s24, 1
      %p42 = por %p40, %p41
      %p43 = scmp.ne.s32.totalorder %s32, %s33
      %p44 = scmp.eq.s32.totalorder %s24, 0
      %p45 = por %p43, %p44
      %p46 = scmp.ne.s32.totalorder %s32, %s33
      %p47 = scmp.eq.s32.totalorder %s25, 1
      %p48 = por %p46, %p47
      %p50 = scmp.ne.s32.totalorder %s33, %s49
      %p51 = scmp.eq.s32.totalorder %s25, 0
      %p52 = por %p50, %p51
      %s54 = sadd.s32 %s53, 1
      %p57 = scmp.eq.s32.totalorder %s19, 1
      %p58 = scmp.ne.s32.totalorder %s53, %s55
      %p59 = scmp.eq.s32.totalorder %s19, 0
      %p60 = por %p58, %p59
      %p61 = scmp.ne.s32.totalorder %s53, %s55
      %p62 = scmp.eq.s32.totalorder %s24, 1
      %p63 = por %p61, %p62
      %p64 = scmp.ne.s32.totalorder %s55, %s56
      %p65 = scmp.eq.s32.totalorder %s24, 0
      %p66 = por %p64, %p65
      %p67 = scmp.ne.s32.totalorder %s55, %s56
      %p68 = scmp.eq.s32.totalorder %s25, 1
      %p69 = por %p67, %p68
      %p71 = scmp.ne.s32.totalorder %s56, %s70
      %p72 = scmp.eq.s32.totalorder %s25, 0
      %p73 = por %p71, %p72
      %s75 = sadd.s32 %s74, 1
      %p78 = scmp.eq.s32.totalorder %s19, 1
      %p79 = scmp.ne.s32.totalorder %s74, %s76
      %p80 = scmp.eq.s32.totalorder %s19, 0
      %p81 = por %p79, %p80
      %p82 = scmp.ne.s32.totalorder %s74, %s76
      %p83 = scmp.eq.s32.totalorder %s24, 1
      %p84 = por %p82, %p83
      %p85 = scmp.ne.s32.totalorder %s76, %s77
      %p86 = scmp.eq.s32.totalorder %s24, 0
      %p87 = por %p85, %p86
      %p88 = scmp.ne.s32.totalorder %s76, %s77
      %p89 = scmp.eq.s32.totalorder %s25, 1
      %p90 = por %p88, %p89
      %p92 = scmp.ne.s32.totalorder %s77, %s91
      %p93 = scmp.eq.s32.totalorder %s25, 0
      %p94 = por %p92, %p93
      %s96 = sadd.s32 %s95, 1
      %p99 = scmp.eq.s32.totalorder %s19, 1
      %p100 = scmp.ne.s32.totalorder %s95, %s97
      %p101 = scmp.eq.s32.totalorder %s19, 0
      %p102 = por %p100, %p101
      %p103 = scmp.ne.s32.totalorder %s95, %s97
      %p104 = scmp.eq.s32.totalorder %s24, 1
      %p105 = por %p103, %p104
      %p106 = scmp.ne.s32.totalorder %s97, %s98
      %p107 = scmp.eq.s32.totalorder %s24, 0
      %p108 = por %p106, %p107
      %p109 = scmp.ne.s32.totalorder %s97, %s98
      %p110 = scmp.eq.s32.totalorder %s25, 1
      %p111 = por %p109, %p110
      %p113 = scmp.ne.s32.totalorder %s98, %s112
      %p114 = scmp.eq.s32.totalorder %s25, 0
      %p115 = por %p113, %p114
      %s117 = sadd.s32 %s116, 1
      %p120 = scmp.eq.s32.totalorder %s19, 1
      %p121 = scmp.ne.s32.totalorder %s116, %s118
      %p122 = scmp.eq.s32.totalorder %s19, 0
      %p123 = por %p121, %p122
      %p124 = scmp.ne.s32.totalorder %s116, %s118
      %p125 = scmp.eq.s32.totalorder %s24, 1
      %p126 = por %p124, %p125
      %p127 = scmp.ne.s32.totalorder %s118, %s119
      %p128 = scmp.eq.s32.totalorder %s24, 0
      %p129 = por %p127, %p128
      %p130 = scmp.ne.s32.totalorder %s118, %s119
      %p131 = scmp.eq.s32.totalorder %s25, 1
      %p132 = por %p130, %p131
      %p134 = scmp.ne.s32.totalorder %s119, %s133
      %p135 = scmp.eq.s32.totalorder %s25, 0
      %p136 = por %p134, %p135
      %s138 = sadd.s32 %s137, 1
      %p141 = scmp.eq.s32.totalorder %s19, 1
      %p142 = scmp.ne.s32.totalorder %s137, %s139
      %p143 = scmp.eq.s32.totalorder %s19, 0
      %p144 = por %p142, %p143
      %p145 = scmp.ne.s32.totalorder %s137, %s139
      %p146 = scmp.eq.s32.totalorder %s24, 1
      %p147 = por %p145, %p146
      %p148 = scmp.ne.s32.totalorder %s139, %s140
      %p149 = scmp.eq.s32.totalorder %s24, 0
      %p150 = por %p148, %p149
      %p151 = scmp.ne.s32.totalorder %s139, %s140
      %p152 = scmp.eq.s32.totalorder %s25, 1
      %p153 = por %p151, %p152
      %p155 = scmp.ne.s32.totalorder %s140, %s154
      %p156 = scmp.eq.s32.totalorder %s25, 0
      %p157 = por %p155, %p156
      %s159 = sadd.s32 %s158, 1
      %p162 = scmp.eq.s32.totalorder %s19, 1
      %p163 = scmp.ne.s32.totalorder %s158, %s160
      %p164 = scmp.eq.s32.totalorder %s19, 0
      %p165 = por %p163, %p164
      %p166 = scmp.ne.s32.totalorder %s158, %s160
      %p167 = scmp.eq.s32.totalorder %s24, 1
      %p168 = por %p166, %p167
      %p169 = scmp.ne.s32.totalorder %s160, %s161
      %p170 = scmp.eq.s32.totalorder %s24, 0
      %p171 = por %p169, %p170
      %p172 = scmp.ne.s32.totalorder %s160, %s161
      %p173 = scmp.eq.s32.totalorder %s25, 1
      %p174 = por %p172, %p173
      %p176 = scmp.ne.s32.totalorder %s161, %s175
      %p177 = scmp.eq.s32.totalorder %s25, 0
      %p178 = por %p176, %p177
      %s179 = ssub.s32 %s19, %s26
      %p180 = scmp.eq.s32.totalorder %s179, 0
      %s182 = sadd.s32 %s181, 1
      %s183 = scalar_select %p180, %s181, %s182
      %p186 = pneg %p180
      %p187 = scmp.eq.s32.totalorder %s19, 1
      %p188 = por %p186, %p187
      %p189 = scmp.ne.s32.totalorder %s181, %s184
      %p190 = scmp.eq.s32.totalorder %s19, 0
      %p191 = por %p189, %p190
      %p192 = scmp.ne.s32.totalorder %s181, %s184
      %p193 = scmp.eq.s32.totalorder %s24, 1
      %p194 = por %p192, %p193
      %p195 = scmp.ne.s32.totalorder %s184, %s185
      %p196 = scmp.eq.s32.totalorder %s24, 0
      %p197 = por %p195, %p196
      %p198 = scmp.ne.s32.totalorder %s184, %s185
      %p199 = scmp.eq.s32.totalorder %s25, 1
      %p200 = por %p198, %p199
      %p202 = scmp.ne.s32.totalorder %s185, %s201
      %p203 = scmp.eq.s32.totalorder %s25, 0
      %p204 = por %p202, %p203
      %p205 = scmp.le.s32.totalorder 1, %s19
      %p206 = scmp.lt.s32.totalorder %s19, 3
      %p207 = pnand %p205, %p206
      %p208 = pneg %p207
      // Predicated region
      $region9: #{tpu_custom_call.1} parent=5 // pred_check
        _
      $region10: #{tpu_custom_call.1} parent=5 // pred_check_branch
        %210 = sbr.rel (%p207) target = $region12
      $region11: #{tpu_custom_call.1} parent=5 // pred_region
        %s211 = ssub.s32 %s19, 1
        // Predicated region
        $region13: #{tpu_custom_call.1} parent=11 // pred_check
          %p212 = pneg %p66
        $region14: #{tpu_custom_call.1} parent=11 // pred_check_branch
          %214 = sbr.rel (%p212) target = $region16
        $region15: #{tpu_custom_call.1} parent=11 // pred_region
          _
        $region16: #{tpu_custom_call.1} parent=11 // pred_fallthru
          _
        // Predicated region
        $region17: #{tpu_custom_call.1} parent=11 // pred_check
          %p215 = pneg %p87
        $region18: #{tpu_custom_call.1} parent=11 // pred_check_branch
          %217 = sbr.rel (%p215) target = $region20
        $region19: #{tpu_custom_call.1} parent=11 // pred_region
          _
        $region20: #{tpu_custom_call.1} parent=11 // pred_fallthru
          _
        // Predicated region
        $region21: #{tpu_custom_call.1} parent=11 // pred_check
          %p218 = pneg %p108
        $region22: #{tpu_custom_call.1} parent=11 // pred_check_branch
          %220 = sbr.rel (%p218) target = $region24
        $region23: #{tpu_custom_call.1} parent=11 // pred_region
          _
        $region24: #{tpu_custom_call.1} parent=11 // pred_fallthru
          _
        // Predicated region
        $region25: #{tpu_custom_call.1} parent=11 // pred_check
          %p221 = pneg %p129
        $region26: #{tpu_custom_call.1} parent=11 // pred_check_branch
          %223 = sbr.rel (%p221) target = $region28
        $region27: #{tpu_custom_call.1} parent=11 // pred_region
          _
        $region28: #{tpu_custom_call.1} parent=11 // pred_fallthru
          _
        // Predicated region
        $region29: #{tpu_custom_call.1} parent=11 // pred_check
          %p224 = pneg %p150
        $region30: #{tpu_custom_call.1} parent=11 // pred_check_branch
          %226 = sbr.rel (%p224) target = $region32
        $region31: #{tpu_custom_call.1} parent=11 // pred_region
          _
        $region32: #{tpu_custom_call.1} parent=11 // pred_fallthru
          _
        // Predicated region
        $region33: #{tpu_custom_call.1} parent=11 // pred_check
          %p227 = pneg %p171
        $region34: #{tpu_custom_call.1} parent=11 // pred_check_branch
          %229 = sbr.rel (%p227) target = $region36
        $region35: #{tpu_custom_call.1} parent=11 // pred_region
          _
        $region36: #{tpu_custom_call.1} parent=11 // pred_fallthru
          _
      $region12: #{tpu_custom_call.1} parent=5 // pred_fallthru
        _
      %p230 = scmp.lt.s32.totalorder %s19, 2
      // Predicated region
      $region37: #{tpu_custom_call.1} parent=5 // pred_check
        %p231 = pneg %p230
      $region38: #{tpu_custom_call.1} parent=5 // pred_check_branch
        %233 = sbr.rel (%p231) target = $region40
      $region39: #{tpu_custom_call.1} parent=5 // pred_region
        // Predicated region
        $region41: #{tpu_custom_call.1} parent=39 // pred_check
          %p234 = pneg %p39
        $region42: #{tpu_custom_call.1} parent=39 // pred_check_branch
          %236 = sbr.rel (%p234) target = $region44
        $region43: #{tpu_custom_call.1} parent=39 // pred_region
          %s237 = sand.u32 %s29, 1
          %s238 = scalar_lea.sflag [#allocation4], %s237
          %s239 = sand.u32 %s29, 1
          %s240 = smul.addr %s239, 16
          %s241 = scalar_lea.vmem [#allocation3], %s240
          %243 = vsyncadd %s238, 0
          %s244 = smul.addr %s19, 2
          %s245 = smul.addr %s244, 8
          %s246 = scalar_lea.hbm %s0, %s245
          %s248 = sshll.u32 %s246, 4
          %s249 = int_to_ptr.hbm [resolvable:$true] %s248
          %s250 = sshll.u32 %s241, 4
          %s251 = int_to_ptr.vmem [resolvable:$true] %s250
          %253 = dma.hbm_to_vmem [thread:$0]  %s249, 256, %s251, %s238
        $region44: #{tpu_custom_call.1} parent=39 // pred_fallthru
          _
      $region40: #{tpu_custom_call.1} parent=5 // pred_fallthru
        _
      %p254 = scmp.le.s32.totalorder 1, %s19
      %p255 = scmp.lt.s32.totalorder %s19, 3
      %p256 = pnand %p254, %p255
      %p257 = pneg %p256
      // Predicated region
      $region45: #{tpu_custom_call.1} parent=5 // pred_check
        _
      $region46: #{tpu_custom_call.1} parent=5 // pred_check_branch
        %259 = sbr.rel (%p256) target = $region48
      $region47: #{tpu_custom_call.1} parent=5 // pred_region
        %s260 = ssub.s32 %s19, 1
        %s261 = sand.u32 %s32, 1
        %s262 = scalar_lea.sflag [#allocation4], %s261
        %s263 = sand.u32 %s32, 1
        %s264 = smul.addr %s263, 16
        %s265 = scalar_lea.vmem [#allocation3], %s264
        // Predicated region
        $region49: #{tpu_custom_call.1} parent=47 // pred_check
          %p266 = pneg %p45
        $region50: #{tpu_custom_call.1} parent=47 // pred_check_branch
          %268 = sbr.rel (%p266) target = $region52
        $region51: #{tpu_custom_call.1} parent=47 // pred_region
          %270 = dma.done %s262, 256
        $region52: #{tpu_custom_call.1} parent=47 // pred_fallthru
          _
        %s271 = sand.u32 %s32, 1
        %s272 = scalar_lea.sflag [#allocation4], %s271
        %s273 = sand.u32 %s32, 1
        %s274 = smul.addr %s273, 16
        %s275 = scalar_lea.vmem [#allocation3], %s274
        %p276 = pneg %p45
        %p277 = pneg %p42
        %p278 = pneg %p66
        %p279 = pneg %p63
        %p280 = pneg %p87
        %p281 = pneg %p84
        %p282 = pneg %p108
        %p283 = pneg %p105
        %p284 = pneg %p129
        %p285 = pneg %p126
        %p286 = pneg %p150
        %p287 = pneg %p147
        %p288 = pneg %p171
        %p289 = pneg %p168
        %p290 = pneg %p197
        %p291 = pneg %p194
        %s292 = sand.u32 %s184, 1
        %s293 = scalar_lea.sflag [#allocation5], %s292
        %s294 = sand.u32 %s184, 1
        %s295 = smul.addr %s294, 8
        %s296 = scalar_lea.vmem [#allocation6], %s295
        %v298 = vld [vmem:[%s265] sm:$0xff]
        %v299 = vld [vmem:[%s265 + $0x8] sm:$0xff]
        %v300 = vld [vmem:[%s1] sm:$0xff]
        %302 = vset.pattern.permute.xlu0 0
        %303 = vperm.xlu0 %302, %v300
        %v304 = vpop.permute.xlu0 %303
        %v306 = vmul.f32 %v298, %v304
        %v307 = vmul.f32 %v299, %v304
        %v308 = vld [vmem:[%s2] sm:$0xff]
        %310 = vset.pattern.permute.xlu0 0
        %311 = vperm.xlu0 %310, %v308
        %v312 = vpop.permute.xlu0 %311
        %v314 = vadd.f32 %v306, %v312
        %v315 = vadd.f32 %v307, %v312
        %v316 = vmax.f32 %v314, 0.0
        %v317 = vmax.f32 %v315, 0.0
        %v318 = vld [vmem:[%s3] sm:$0xf]
        %v319 = vld [vmem:[%s3 + $0x4] sm:$0xf]
        %v320 = vpack.c.bf16 %v316, %v316
        %v321 = vpack.c.bf16 %v317, %v317
        %v322 = vld [vmem:[%s4] sm:$0xff]
        %v323 = vld [vmem:[%s4 + $0x8] sm:$0xff]
        %325 = vset.pattern.permute.xlu0 0
        %326 = vperm.xlu0 %325, %v322
        %v327 = vpop.permute.xlu0 %326
        %330 = vset.pattern.permute.xlu0 0
        %331 = vperm.xlu0 %330, %v323
        %v332 = vpop.permute.xlu0 %331
        %v336 = vunpack.c.l.b16 %v318
        %v337 = vunpack.c.l.b16 %v319
        %v338 = vpack.c.b16 %v337, %v336
        %vm339 = vcmask 64512
        %v341 = vsel %vm339, %v338, 0
        %vm343 = vcmask 1043456
        %v345 = vsel %vm343, %v320, 0
        %v348 = vsel %vm343, %v321, 0
        %350 = vmatpush.bf16.msra.mxu0 0
        %351 = vmatpush.bf16.msra.mxu0 0
        %352 = vmatpush.bf16.msra.mxu0 0
        %353 = vmatpush.bf16.msra.mxu0 0
        %354 = vmatpush.bf16.msra.mxu0 0
        %355 = vmatpush.bf16.msra.mxu0 0
        %356 = vmatpush.bf16.msra.mxu0 0
        %357 = vmatpush.bf16.msra.mxu0 %v345
        %358 = vmatmul.bf16.gmra.mxu0 %v341
        %v359 = vpop.f32.mrf.mxu0
        %v360 = vadd.f32 %v327, %v359
        %v361 = vpop.f32.mrf.mxu0
        %v362 = vadd.f32 %v332, %v361
        %363 = vdwg.mxu0
        %364 = vmatpush.bf16.msra.mxu0 0
        %365 = vmatpush.bf16.msra.mxu0 0
        %366 = vmatpush.bf16.msra.mxu0 0
        %367 = vmatpush.bf16.msra.mxu0 0
        %368 = vmatpush.bf16.msra.mxu0 0
        %369 = vmatpush.bf16.msra.mxu0 0
        %370 = vmatpush.bf16.msra.mxu0 0
        %371 = vmatpush.bf16.msra.mxu0 %v348
        %372 = vmatmul.bf16.gmra.mxu0 %v341
        %v373 = vpop.f32.mrf.mxu0
        %v374 = vadd.f32 %v327, %v373
        %v375 = vpop.f32.mrf.mxu0
        %v376 = vadd.f32 %v332, %v375
        %377 = vdwg.mxu0
        %v378 = vmax.f32 %v360, 0.0
        %v379 = vmax.f32 %v374, 0.0
        %v380 = vmax.f32 %v362, 0.0
        %v381 = vmax.f32 %v376, 0.0
        %382 = vst [vmem:[#allocation2] sm:$0xff] 0.0
        %383 = vst [vmem:[#allocation2 + $0x8] sm:$0xff] 0.0
        %384 = vst [vmem:[#allocation2 + $0x10] sm:$0xff] 0.0
        %385 = vst [vmem:[#allocation2 + $0x18] sm:$0xff] 0.0
        %386 = vst [vmem:[#allocation2 + $0x20] sm:$0xff] 0.0
        %387 = vst [vmem:[#allocation2 + $0x28] sm:$0xff] 0.0
        %388 = vst [vmem:[#allocation2 + $0x30] sm:$0xff] 0.0
        %389 = vst [vmem:[#allocation2 + $0x38] sm:$0xff] 0.0
        %390 = vst [vmem:[#allocation2 + $0x8] sm:$0xff] %v378
        %391 = vst [vmem:[#allocation2 + $0x10] sm:$0xff] %v379
        %392 = vst [vmem:[#allocation2 + $0x28] sm:$0xff] %v380
        %393 = vst [vmem:[#allocation2 + $0x30] sm:$0xff] %v381
        %v394 = vld [vmem:[#allocation2] sm:$0xff]
        %v395 = vld [vmem:[#allocation2 + $0x8] sm:$0xff]
        %v396 = vld [vmem:[#allocation2 + $0x10] sm:$0xff]
        %v397 = vld [vmem:[#allocation2 + $0x20] sm:$0xff]
        %v398 = vld [vmem:[#allocation2 + $0x28] sm:$0xff]
        %v399 = vld [vmem:[#allocation2 + $0x30] sm:$0xff]
        %v400 = vld [vmem:[%s6] sm:$0x3]
        %v402 = vperm.slane %v400, 0
        %v403 = vperm.slane %v400, 1
        %404 = vrot.lane.b32.xlu0 %v402, 111
        %v405 = vpop.permute.xlu0 %404
        %406 = vrot.lane.b32.xlu0 %v403, 111
        %v407 = vpop.permute.xlu0 %406
        %vm408 = vcmask 908288
        %v409 = vsel %vm408, %v405, %v407
        %v413 = vmul.f32 %v394, %v405
        %v414 = vmul.f32 %v395, %v409
        %v415 = vmul.f32 %v396, %v407
        %v416 = vmul.f32 %v397, %v405
        %v417 = vmul.f32 %v398, %v409
        %v418 = vmul.f32 %v399, %v407
        %v419 = vpack.c.bf16 %v416, %v413
        %v420 = vpack.c.bf16 %v417, %v414
        %v421 = vpack.c.bf16 %v418, %v415
        %v422 = vld [vmem:[%s5] sm:$0x3]
        %s423 = scalar_lea.vmem %s6, 2
        %v424 = vld [vmem:[%s423] sm:$0x3]
        %v426 = vperm.slane %v424, 0
        %v427 = vperm.slane %v424, 1
        %430 = vrot.lane.b32.xlu0 %v426, 112
        %v431 = vpop.permute.xlu0 %430
        %432 = vrot.lane.b32.xlu0 %v427, 112
        %v433 = vpop.permute.xlu0 %432
        %vm434 = vcmask 916480
        %v435 = vsel %vm434, %v431, %v433
        %v439 = vmul.f32 %v394, %v431
        %v440 = vmul.f32 %v395, %v435
        %v441 = vmul.f32 %v396, %v433
        %v442 = vmul.f32 %v397, %v431
        %v443 = vmul.f32 %v398, %v435
        %v444 = vmul.f32 %v399, %v433
        %v445 = vpack.c.bf16 %v442, %v439
        %v446 = vpack.c.bf16 %v443, %v440
        %v447 = vpack.c.bf16 %v444, %v441
        %s448 = scalar_lea.vmem %s5, 2
        %v449 = vld [vmem:[%s448] sm:$0x3]
        %453 = vrot.lane.b32.xlu0 %v445, 16
        %v454 = vpop.permute.xlu0 %453
        %455 = vrot.lane.b32.xlu0 %v446, 16
        %v456 = vpop.permute.xlu0 %455
        %457 = vrot.lane.b32.xlu0 %v447, 16
        %v458 = vpop.permute.xlu0 %457
        %vm459 = vcmask 130048
        %v460 = vsel %vm459, %v454, %v456
        %v461 = vsel %vm459, %v456, %v458
        %vm464 = vcmask 130048
        %v466 = vsel %vm464, %v449, 0
        %468 = vmatpush.bf16.msra.mxu0 0
        %469 = vmatpush.bf16.msra.mxu0 0
        %470 = vmatpush.bf16.msra.mxu0 0
        %471 = vmatpush.bf16.msra.mxu0 0
        %472 = vmatpush.bf16.msra.mxu0 0
        %473 = vmatpush.bf16.msra.mxu0 0
        %474 = vmatpush.bf16.msra.mxu0 0
        %475 = vmatpush.bf16.msra.mxu0 %v460
        %476 = vmatmul.bf16.gmra.mxu0 %v466
        %v477 = vpop.f32.mrf.mxu0
        %v478 = vadd.f32 0.0, %v477
        %v479 = vpop.f32.mrf.mxu0
        %480 = vdwg.mxu0
        %481 = vmatpush.bf16.msra.mxu0 0
        %482 = vmatpush.bf16.msra.mxu0 0
        %483 = vmatpush.bf16.msra.mxu0 0
        %484 = vmatpush.bf16.msra.mxu0 0
        %485 = vmatpush.bf16.msra.mxu0 0
        %486 = vmatpush.bf16.msra.mxu0 0
        %487 = vmatpush.bf16.msra.mxu0 0
        %488 = vmatpush.bf16.msra.mxu0 %v461
        %489 = vmatmul.bf16.gmra.mxu0 %v466
        %v490 = vpop.f32.mrf.mxu0
        %v491 = vadd.f32 0.0, %v490
        %v492 = vpop.f32.mrf.mxu0
        %493 = vdwg.mxu0
        %497 = vrot.lane.b32.xlu0 %v419, 17
        %v498 = vpop.permute.xlu0 %497
        %499 = vrot.lane.b32.xlu0 %v420, 17
        %v500 = vpop.permute.xlu0 %499
        %501 = vrot.lane.b32.xlu0 %v421, 17
        %v502 = vpop.permute.xlu0 %501
        %vm503 = vcmask 138240
        %v504 = vsel %vm503, %v498, %v500
        %v505 = vsel %vm503, %v500, %v502
        %v509 = vsel %vm464, %v422, 0
        %511 = vmatpush.bf16.msra.mxu0 0
        %512 = vmatpush.bf16.msra.mxu0 0
        %513 = vmatpush.bf16.msra.mxu0 0
        %514 = vmatpush.bf16.msra.mxu0 0
        %515 = vmatpush.bf16.msra.mxu0 0
        %516 = vmatpush.bf16.msra.mxu0 0
        %517 = vmatpush.bf16.msra.mxu0 0
        %518 = vmatpush.bf16.msra.mxu0 %v504
        %519 = vmatmul.bf16.gmra.mxu0 %v509
        %v520 = vpop.f32.mrf.mxu0
        %v521 = vadd.f32 %v478, %v520
        %v522 = vpop.f32.mrf.mxu0
        %523 = vdwg.mxu0
        %524 = vmatpush.bf16.msra.mxu0 0
        %525 = vmatpush.bf16.msra.mxu0 0
        %526 = vmatpush.bf16.msra.mxu0 0
        %527 = vmatpush.bf16.msra.mxu0 0
        %528 = vmatpush.bf16.msra.mxu0 0
        %529 = vmatpush.bf16.msra.mxu0 0
        %530 = vmatpush.bf16.msra.mxu0 0
        %531 = vmatpush.bf16.msra.mxu0 %v505
        %532 = vmatmul.bf16.gmra.mxu0 %v509
        %v533 = vpop.f32.mrf.mxu0
        %v534 = vadd.f32 %v491, %v533
        %v535 = vpop.f32.mrf.mxu0
        %536 = vdwg.mxu0
        %s537 = scalar_lea.vmem %s6, 4
        %v538 = vld [vmem:[%s537] sm:$0x3]
        %v540 = vperm.slane %v538, 0
        %v541 = vperm.slane %v538, 1
        %542 = vrot.lane.b32.xlu0 %v540, 113
        %v543 = vpop.permute.xlu0 %542
        %544 = vrot.lane.b32.xlu0 %v541, 113
        %v545 = vpop.permute.xlu0 %544
        %vm546 = vcmask 924672
        %v547 = vsel %vm546, %v543, %v545
        %v551 = vmul.f32 %v394, %v543
        %v552 = vmul.f32 %v395, %v547
        %v553 = vmul.f32 %v396, %v545
        %v554 = vmul.f32 %v397, %v543
        %v555 = vmul.f32 %v398, %v547
        %v556 = vmul.f32 %v399, %v545
        %v557 = vpack.c.bf16 %v554, %v551
        %v558 = vpack.c.bf16 %v555, %v552
        %v559 = vpack.c.bf16 %v556, %v553
        %s560 = scalar_lea.vmem %s5, 4
        %v561 = vld [vmem:[%s560] sm:$0x3]
        %565 = vrot.lane.b32.xlu0 %v557, 15
        %v566 = vpop.permute.xlu0 %565
        %567 = vrot.lane.b32.xlu0 %v558, 15
        %v568 = vpop.permute.xlu0 %567
        %569 = vrot.lane.b32.xlu0 %v559, 15
        %v570 = vpop.permute.xlu0 %569
        %vm571 = vcmask 121856
        %v572 = vsel %vm571, %v566, %v568
        %v573 = vsel %vm571, %v568, %v570
        %v577 = vsel %vm464, %v561, 0
        %579 = vmatpush.bf16.msra.mxu0 0
        %580 = vmatpush.bf16.msra.mxu0 0
        %581 = vmatpush.bf16.msra.mxu0 0
        %582 = vmatpush.bf16.msra.mxu0 0
        %583 = vmatpush.bf16.msra.mxu0 0
        %584 = vmatpush.bf16.msra.mxu0 0
        %585 = vmatpush.bf16.msra.mxu0 0
        %586 = vmatpush.bf16.msra.mxu0 %v572
        %587 = vmatmul.bf16.gmra.mxu0 %v577
        %v588 = vpop.f32.mrf.mxu0
        %v589 = vadd.f32 0.0, %v588
        %v590 = vpop.f32.mrf.mxu0
        %591 = vdwg.mxu0
        %592 = vmatpush.bf16.msra.mxu0 0
        %593 = vmatpush.bf16.msra.mxu0 0
        %594 = vmatpush.bf16.msra.mxu0 0
        %595 = vmatpush.bf16.msra.mxu0 0
        %596 = vmatpush.bf16.msra.mxu0 0
        %597 = vmatpush.bf16.msra.mxu0 0
        %598 = vmatpush.bf16.msra.mxu0 0
        %599 = vmatpush.bf16.msra.mxu0 %v573
        %600 = vmatmul.bf16.gmra.mxu0 %v577
        %v601 = vpop.f32.mrf.mxu0
        %v602 = vadd.f32 0.0, %v601
        %v603 = vpop.f32.mrf.mxu0
        %604 = vdwg.mxu0
        %v605 = vadd.f32 %v521, %v589
        %v606 = vadd.f32 %v534, %v602
        %607 = vrot.lane.b32.xlu0 %v402, 127
        %v608 = vpop.permute.xlu0 %607
        %609 = vrot.lane.b32.xlu0 %v403, 127
        %v610 = vpop.permute.xlu0 %609
        %vm611 = vcmask 1039360
        %v612 = vsel %vm611, %v608, %v610
        %v616 = vmul.f32 %v394, %v608
        %v617 = vmul.f32 %v395, %v612
        %v618 = vmul.f32 %v396, %v610
        %v619 = vmul.f32 %v397, %v608
        %v620 = vmul.f32 %v398, %v612
        %v621 = vmul.f32 %v399, %v610
        %v622 = vpack.c.bf16 %v619, %v616
        %v623 = vpack.c.bf16 %v620, %v617
        %v624 = vpack.c.bf16 %v621, %v618
        %s625 = scalar_lea.vmem %s5, 6
        %v626 = vld [vmem:[%s625] sm:$0x3]
        %630 = vrot.lane.b32.xlu0 %v622, 1
        %v631 = vpop.permute.xlu0 %630
        %632 = vrot.lane.b32.xlu0 %v623, 1
        %v633 = vpop.permute.xlu0 %632
        %634 = vrot.lane.b32.xlu0 %v624, 1
        %v635 = vpop.permute.xlu0 %634
        %vm636 = vcmask 7168
        %v637 = vsel %vm636, %v631, %v633
        %v638 = vsel %vm636, %v633, %v635
        %v642 = vsel %vm464, %v626, 0
        %644 = vmatpush.bf16.msra.mxu0 0
        %645 = vmatpush.bf16.msra.mxu0 0
        %646 = vmatpush.bf16.msra.mxu0 0
        %647 = vmatpush.bf16.msra.mxu0 0
        %648 = vmatpush.bf16.msra.mxu0 0
        %649 = vmatpush.bf16.msra.mxu0 0
        %650 = vmatpush.bf16.msra.mxu0 0
        %651 = vmatpush.bf16.msra.mxu0 %v637
        %652 = vmatmul.bf16.gmra.mxu0 %v642
        %v653 = vpop.f32.mrf.mxu0
        %v654 = vadd.f32 0.0, %v653
        %v655 = vpop.f32.mrf.mxu0
        %656 = vdwg.mxu0
        %657 = vmatpush.bf16.msra.mxu0 0
        %658 = vmatpush.bf16.msra.mxu0 0
        %659 = vmatpush.bf16.msra.mxu0 0
        %660 = vmatpush.bf16.msra.mxu0 0
        %661 = vmatpush.bf16.msra.mxu0 0
        %662 = vmatpush.bf16.msra.mxu0 0
        %663 = vmatpush.bf16.msra.mxu0 0
        %664 = vmatpush.bf16.msra.mxu0 %v638
        %665 = vmatmul.bf16.gmra.mxu0 %v642
        %v666 = vpop.f32.mrf.mxu0
        %v667 = vadd.f32 0.0, %v666
        %v668 = vpop.f32.mrf.mxu0
        %669 = vdwg.mxu0
        %v670 = vadd.f32 %v605, %v654
        %v671 = vadd.f32 %v606, %v667
        %v672 = vmul.f32 %v395, %v426
        %v673 = vmul.f32 %v396, %v427
        %v674 = vmul.f32 %v398, %v426
        %v675 = vmul.f32 %v399, %v427
        %v676 = vpack.c.bf16 %v674, %v672
        %v677 = vpack.c.bf16 %v675, %v673
        %s678 = scalar_lea.vmem %s5, 8
        %v679 = vld [vmem:[%s678] sm:$0x3]
        %v681 = vsel %vm464, %v679, 0
        %683 = vmatpush.bf16.msra.mxu0 0
        %684 = vmatpush.bf16.msra.mxu0 0
        %685 = vmatpush.bf16.msra.mxu0 0
        %686 = vmatpush.bf16.msra.mxu0 0
        %687 = vmatpush.bf16.msra.mxu0 0
        %688 = vmatpush.bf16.msra.mxu0 0
        %689 = vmatpush.bf16.msra.mxu0 0
        %690 = vmatpush.bf16.msra.mxu0 %v676
        %691 = vmatmul.bf16.gmra.mxu0 %v681
        %v692 = vpop.f32.mrf.mxu0
        %v693 = vadd.f32 0.0, %v692
        %v694 = vpop.f32.mrf.mxu0
        %695 = vdwg.mxu0
        %696 = vmatpush.bf16.msra.mxu0 0
        %697 = vmatpush.bf16.msra.mxu0 0
        %698 = vmatpush.bf16.msra.mxu0 0
        %699 = vmatpush.bf16.msra.mxu0 0
        %700 = vmatpush.bf16.msra.mxu0 0
        %701 = vmatpush.bf16.msra.mxu0 0
        %702 = vmatpush.bf16.msra.mxu0 0
        %703 = vmatpush.bf16.msra.mxu0 %v677
        %704 = vmatmul.bf16.gmra.mxu0 %v681
        %v705 = vpop.f32.mrf.mxu0
        %v706 = vadd.f32 0.0, %v705
        %v707 = vpop.f32.mrf.mxu0
        %708 = vdwg.mxu0
        %v709 = vadd.f32 %v670, %v693
        %v710 = vadd.f32 %v671, %v706
        %v711 = vld [vmem:[#allocation2 + $0x8] sm:$0xff]
        %v712 = vld [vmem:[#allocation2 + $0x10] sm:$0xff]
        %v713 = vld [vmem:[#allocation2 + $0x18] sm:$0xff]
        %v714 = vld [vmem:[#allocation2 + $0x28] sm:$0xff]
        %v715 = vld [vmem:[#allocation2 + $0x30] sm:$0xff]
        %v716 = vld [vmem:[#allocation2 + $0x38] sm:$0xff]
        %717 = vrot.lane.b32.xlu0 %v540, 1
        %v718 = vpop.permute.xlu0 %717
        %719 = vrot.lane.b32.xlu0 %v541, 1
        %v720 = vpop.permute.xlu0 %719
        %vm721 = vcmask 7168
        %v722 = vsel %vm721, %v718, %v720
        %v726 = vmul.f32 %v711, %v718
        %v727 = vmul.f32 %v712, %v722
        %v728 = vmul.f32 %v713, %v720
        %v729 = vmul.f32 %v714, %v718
        %v730 = vmul.f32 %v715, %v722
        %v731 = vmul.f32 %v716, %v720
        %v732 = vpack.c.bf16 %v729, %v726
        %v733 = vpack.c.bf16 %v730, %v727
        %v734 = vpack.c.bf16 %v731, %v728
        %s735 = scalar_lea.vmem %s5, 10
        %v736 = vld [vmem:[%s735] sm:$0x3]
        %740 = vrot.lane.b32.xlu0 %v732, 127
        %v741 = vpop.permute.xlu0 %740
        %742 = vrot.lane.b32.xlu0 %v733, 127
        %v743 = vpop.permute.xlu0 %742
        %744 = vrot.lane.b32.xlu0 %v734, 127
        %v745 = vpop.permute.xlu0 %744
        %vm746 = vcmask 1039360
        %v747 = vsel %vm746, %v741, %v743
        %v748 = vsel %vm746, %v743, %v745
        %v752 = vsel %vm464, %v736, 0
        %754 = vmatpush.bf16.msra.mxu0 0
        %755 = vmatpush.bf16.msra.mxu0 0
        %756 = vmatpush.bf16.msra.mxu0 0
        %757 = vmatpush.bf16.msra.mxu0 0
        %758 = vmatpush.bf16.msra.mxu0 0
        %759 = vmatpush.bf16.msra.mxu0 0
        %760 = vmatpush.bf16.msra.mxu0 0
        %761 = vmatpush.bf16.msra.mxu0 %v747
        %762 = vmatmul.bf16.gmra.mxu0 %v752
        %v763 = vpop.f32.mrf.mxu0
        %v764 = vadd.f32 0.0, %v763
        %v765 = vpop.f32.mrf.mxu0
        %766 = vdwg.mxu0
        %767 = vmatpush.bf16.msra.mxu0 0
        %768 = vmatpush.bf16.msra.mxu0 0
        %769 = vmatpush.bf16.msra.mxu0 0
        %770 = vmatpush.bf16.msra.mxu0 0
        %771 = vmatpush.bf16.msra.mxu0 0
        %772 = vmatpush.bf16.msra.mxu0 0
        %773 = vmatpush.bf16.msra.mxu0 0
        %774 = vmatpush.bf16.msra.mxu0 %v748
        %775 = vmatmul.bf16.gmra.mxu0 %v752
        %v776 = vpop.f32.mrf.mxu0
        %v777 = vadd.f32 0.0, %v776
        %v778 = vpop.f32.mrf.mxu0
        %779 = vdwg.mxu0
        %v780 = vadd.f32 %v709, %v764
        %v781 = vadd.f32 %v710, %v777
        %782 = vrot.lane.b32.xlu0 %v402, 15
        %v783 = vpop.permute.xlu0 %782
        %784 = vrot.lane.b32.xlu0 %v403, 15
        %v785 = vpop.permute.xlu0 %784
        %vm786 = vcmask 121856
        %v787 = vsel %vm786, %v783, %v785
        %v791 = vmul.f32 %v711, %v783
        %v792 = vmul.f32 %v712, %v787
        %v793 = vmul.f32 %v713, %v785
        %v794 = vmul.f32 %v714, %v783
        %v795 = vmul.f32 %v715, %v787
        %v796 = vmul.f32 %v716, %v785
        %v797 = vpack.c.bf16 %v794, %v791
        %v798 = vpack.c.bf16 %v795, %v792
        %v799 = vpack.c.bf16 %v796, %v793
        %s800 = scalar_lea.vmem %s5, 12
        %v801 = vld [vmem:[%s800] sm:$0x3]
        %805 = vrot.lane.b32.xlu0 %v797, 113
        %v806 = vpop.permute.xlu0 %805
        %807 = vrot.lane.b32.xlu0 %v798, 113
        %v808 = vpop.permute.xlu0 %807
        %809 = vrot.lane.b32.xlu0 %v799, 113
        %v810 = vpop.permute.xlu0 %809
        %vm811 = vcmask 924672
        %v812 = vsel %vm811, %v806, %v808
        %v813 = vsel %vm811, %v808, %v810
        %v817 = vsel %vm464, %v801, 0
        %819 = vmatpush.bf16.msra.mxu0 0
        %820 = vmatpush.bf16.msra.mxu0 0
        %821 = vmatpush.bf16.msra.mxu0 0
        %822 = vmatpush.bf16.msra.mxu0 0
        %823 = vmatpush.bf16.msra.mxu0 0
        %824 = vmatpush.bf16.msra.mxu0 0
        %825 = vmatpush.bf16.msra.mxu0 0
        %826 = vmatpush.bf16.msra.mxu0 %v812
        %827 = vmatmul.bf16.gmra.mxu0 %v817
        %v828 = vpop.f32.mrf.mxu0
        %v829 = vadd.f32 0.0, %v828
        %v830 = vpop.f32.mrf.mxu0
        %831 = vdwg.mxu0
        %832 = vmatpush.bf16.msra.mxu0 0
        %833 = vmatpush.bf16.msra.mxu0 0
        %834 = vmatpush.bf16.msra.mxu0 0
        %835 = vmatpush.bf16.msra.mxu0 0
        %836 = vmatpush.bf16.msra.mxu0 0
        %837 = vmatpush.bf16.msra.mxu0 0
        %838 = vmatpush.bf16.msra.mxu0 0
        %839 = vmatpush.bf16.msra.mxu0 %v813
        %840 = vmatmul.bf16.gmra.mxu0 %v817
        %v841 = vpop.f32.mrf.mxu0
        %v842 = vadd.f32 0.0, %v841
        %v843 = vpop.f32.mrf.mxu0
        %844 = vdwg.mxu0
        %v845 = vadd.f32 %v780, %v829
        %v846 = vadd.f32 %v781, %v842
        %847 = vrot.lane.b32.xlu0 %v426, 16
        %v848 = vpop.permute.xlu0 %847
        %849 = vrot.lane.b32.xlu0 %v427, 16
        %v850 = vpop.permute.xlu0 %849
        %v851 = vsel %vm464, %v848, %v850
        %v855 = vmul.f32 %v711, %v848
        %v856 = vmul.f32 %v712, %v851
        %v857 = vmul.f32 %v713, %v850
        %v858 = vmul.f32 %v714, %v848
        %v859 = vmul.f32 %v715, %v851
        %v860 = vmul.f32 %v716, %v850
        %v861 = vpack.c.bf16 %v858, %v855
        %v862 = vpack.c.bf16 %v859, %v856
        %v863 = vpack.c.bf16 %v860, %v857
        %s864 = scalar_lea.vmem %s5, 14
        %v865 = vld [vmem:[%s864] sm:$0x3]
        %869 = vrot.lane.b32.xlu0 %v861, 112
        %v870 = vpop.permute.xlu0 %869
        %871 = vrot.lane.b32.xlu0 %v862, 112
        %v872 = vpop.permute.xlu0 %871
        %873 = vrot.lane.b32.xlu0 %v863, 112
        %v874 = vpop.permute.xlu0 %873
        %vm875 = vcmask 916480
        %v876 = vsel %vm875, %v870, %v872
        %v877 = vsel %vm875, %v872, %v874
        %v881 = vsel %vm464, %v865, 0
        %883 = vmatpush.bf16.msra.mxu0 0
        %884 = vmatpush.bf16.msra.mxu0 0
        %885 = vmatpush.bf16.msra.mxu0 0
        %886 = vmatpush.bf16.msra.mxu0 0
        %887 = vmatpush.bf16.msra.mxu0 0
        %888 = vmatpush.bf16.msra.mxu0 0
        %889 = vmatpush.bf16.msra.mxu0 0
        %890 = vmatpush.bf16.msra.mxu0 %v876
        %891 = vmatmul.bf16.gmra.mxu0 %v881
        %v892 = vpop.f32.mrf.mxu0
        %v893 = vadd.f32 0.0, %v892
        %v894 = vpop.f32.mrf.mxu0
        %895 = vdwg.mxu0
        %896 = vmatpush.bf16.msra.mxu0 0
        %897 = vmatpush.bf16.msra.mxu0 0
        %898 = vmatpush.bf16.msra.mxu0 0
        %899 = vmatpush.bf16.msra.mxu0 0
        %900 = vmatpush.bf16.msra.mxu0 0
        %901 = vmatpush.bf16.msra.mxu0 0
        %902 = vmatpush.bf16.msra.mxu0 0
        %903 = vmatpush.bf16.msra.mxu0 %v877
        %904 = vmatmul.bf16.gmra.mxu0 %v881
        %v905 = vpop.f32.mrf.mxu0
        %v906 = vadd.f32 0.0, %v905
        %v907 = vpop.f32.mrf.mxu0
        %908 = vdwg.mxu0
        %v909 = vadd.f32 %v845, %v893
        %v910 = vadd.f32 %v846, %v906
        %911 = vrot.lane.b32.xlu0 %v540, 17
        %v912 = vpop.permute.xlu0 %911
        %913 = vrot.lane.b32.xlu0 %v541, 17
        %v914 = vpop.permute.xlu0 %913
        %vm915 = vcmask 138240
        %v916 = vsel %vm915, %v912, %v914
        %v920 = vmul.f32 %v711, %v912
        %v921 = vmul.f32 %v712, %v916
        %v922 = vmul.f32 %v713, %v914
        %v923 = vmul.f32 %v714, %v912
        %v924 = vmul.f32 %v715, %v916
        %v925 = vmul.f32 %v716, %v914
        %v926 = vpack.c.bf16 %v923, %v920
        %v927 = vpack.c.bf16 %v924, %v921
        %v928 = vpack.c.bf16 %v925, %v922
        %s929 = scalar_lea.vmem %s5, 16
        %v930 = vld [vmem:[%s929] sm:$0x3]
        %934 = vrot.lane.b32.xlu0 %v926, 111
        %v935 = vpop.permute.xlu0 %934
        %936 = vrot.lane.b32.xlu0 %v927, 111
        %v937 = vpop.permute.xlu0 %936
        %938 = vrot.lane.b32.xlu0 %v928, 111
        %v939 = vpop.permute.xlu0 %938
        %vm940 = vcmask 908288
        %v941 = vsel %vm940, %v935, %v937
        %v942 = vsel %vm940, %v937, %v939
        %v946 = vsel %vm464, %v930, 0
        %948 = vmatpush.bf16.msra.mxu0 0
        %949 = vmatpush.bf16.msra.mxu0 0
        %950 = vmatpush.bf16.msra.mxu0 0
        %951 = vmatpush.bf16.msra.mxu0 0
        %952 = vmatpush.bf16.msra.mxu0 0
        %953 = vmatpush.bf16.msra.mxu0 0
        %954 = vmatpush.bf16.msra.mxu0 0
        %955 = vmatpush.bf16.msra.mxu0 %v941
        %956 = vmatmul.bf16.gmra.mxu0 %v946
        %v957 = vpop.f32.mrf.mxu0
        %v958 = vadd.f32 0.0, %v957
        %v959 = vpop.f32.mrf.mxu0
        %960 = vdwg.mxu0
        %961 = vmatpush.bf16.msra.mxu0 0
        %962 = vmatpush.bf16.msra.mxu0 0
        %963 = vmatpush.bf16.msra.mxu0 0
        %964 = vmatpush.bf16.msra.mxu0 0
        %965 = vmatpush.bf16.msra.mxu0 0
        %966 = vmatpush.bf16.msra.mxu0 0
        %967 = vmatpush.bf16.msra.mxu0 0
        %968 = vmatpush.bf16.msra.mxu0 %v942
        %969 = vmatmul.bf16.gmra.mxu0 %v946
        %v970 = vpop.f32.mrf.mxu0
        %v971 = vadd.f32 0.0, %v970
        %v972 = vpop.f32.mrf.mxu0
        %973 = vdwg.mxu0
        %v974 = vadd.f32 %v909, %v958
        %v975 = vadd.f32 %v910, %v971
        %v978 = vrot.slane %v975, 4
        %v979 = vsel %vm343, %v974, %v978
        %981 = vst [vmem:[%s296] sm:$0xff] %v979
        %s982 = sand.u32 %s184, 1
        %s983 = scalar_lea.sflag [#allocation5], %s982
        %s984 = sand.u32 %s184, 1
        %s985 = smul.addr %s984, 8
        %s986 = scalar_lea.vmem [#allocation6], %s985
        // Predicated region
        $region53: #{tpu_custom_call.1} parent=47 // pred_check
          %p987 = pneg %p194
        $region54: #{tpu_custom_call.1} parent=47 // pred_check_branch
          %989 = sbr.rel (%p987) target = $region56
        $region55: #{tpu_custom_call.1} parent=47 // pred_region
          %991 = vsyncadd %s983, 0
          %s992 = smul.addr %s24, 2
          %s993 = smul.addr %s992, 4
          %s994 = scalar_lea.hbm %s7, %s993
          %s996 = sshll.u32 %s986, 4
          %s997 = int_to_ptr.vmem [resolvable:$true] %s996
          %s998 = sshll.u32 %s994, 4
          %s999 = int_to_ptr.hbm [resolvable:$true] %s998
          %1001 = dma.vmem_to_hbm [thread:$0]  %s997, 128, %s999, %s983
        $region56: #{tpu_custom_call.1} parent=47 // pred_fallthru
          _
      $region48: #{tpu_custom_call.1} parent=5 // pred_fallthru
        _
      %p1002 = scmp.le.s32.totalorder 2, %s19
      // Predicated region
      $region57: #{tpu_custom_call.1} parent=5 // pred_check
        %p1003 = pneg %p1002
      $region58: #{tpu_custom_call.1} parent=5 // pred_check_branch
        %1005 = sbr.rel (%p1003) target = $region60
      $region59: #{tpu_custom_call.1} parent=5 // pred_region
        %s1006 = ssub.s32 %s19, 2
        // Predicated region
        $region61: #{tpu_custom_call.1} parent=59 // pred_check
          %p1007 = pneg %p200
        $region62: #{tpu_custom_call.1} parent=59 // pred_check_branch
          %1009 = sbr.rel (%p1007) target = $region64
        $region63: #{tpu_custom_call.1} parent=59 // pred_region
          %s1010 = sand.u32 %s185, 1
          %s1011 = scalar_lea.sflag [#allocation5], %s1010
          %s1012 = sand.u32 %s185, 1
          %s1013 = smul.addr %s1012, 8
          %s1014 = scalar_lea.vmem [#allocation6], %s1013
          %1016 = dma.done %s1011, 128
        $region64: #{tpu_custom_call.1} parent=59 // pred_fallthru
          _
      $region60: #{tpu_custom_call.1} parent=5 // pred_fallthru
        _
    $region6: #{tpu_custom_call.1} parent=1 // loop_footer
      %s23 = sadd.s32 1, %s19
    $region7: #{tpu_custom_call.1} parent=1 // loop_footer_branch
      %18 = sbr.rel target = $region3
    $region8: #{tpu_custom_call.1} parent=1 // loop_exit
      _
    %1017 = vsyncpa [#allocation4], 1
    %s1018 = scalar_lea.sflag [#allocation4], 1
    %1019 = vsyncpa %s1018, 1
    %1020 = vsyncpa [#allocation5], 1
    %s1021 = scalar_lea.sflag [#allocation5], 1
    %1022 = vsyncpa %s1021, 1

</llo_original>
